<compile_context>
chip_gen: v7x
topology: tpu7x:2x2x1
jax: 0.10.0
libtpu: 0.0.40
codegen_flags: <defaults>
</compile_context>

<pallas_src>
import functools
import math

import jax
import jax.numpy as jnp
from jax.experimental import pallas as pl
from jax.experimental.pallas import tpu as pltpu


def _round_up(x, m):
    return ((x + m - 1) // m) * m


def classify_kernel(x_ref, w_ref, b_ref, o_ref, acc_ref, *, inv_hw):
    # x_ref  : (tb, F, thw)   input dtype -- one spatial tile of the features
    # w_ref  : (F, CLS_pad)   f32         -- transposed, lane-padded weight
    # b_ref  : (1, CLS_pad)   f32
    # o_ref  : (tb, CLS_pad)  f32
    # acc_ref: (tb, F, thw)   f32 VMEM scratch -- per-lane partial sums
    k = pl.program_id(1)

    @pl.when(k == 0)
    def _init():
        acc_ref[...] = jnp.zeros_like(acc_ref)

    # Elementwise (VPU) accumulation of spatial tiles; no cross-lane work
    # until the final step, so it hides entirely under the x DMA stream.
    acc_ref[...] += x_ref[...].astype(jnp.float32)

    @pl.when(k == pl.num_programs(1) - 1)
    def _finalize():
        # Single cross-lane reduce, then 1/HW scale (== adaptive avg pool).
        pooled = jnp.sum(acc_ref[...], axis=-1) * inv_hw          # (tb, F)
        o_ref[...] = (
            jnp.dot(pooled, w_ref[...], preferred_element_type=jnp.float32)
            + b_ref[...]
        )


def classify_forward(x, weight, bias, *, tb=8, target_tile_bytes=4 << 20):
    """x: (b, n, c, h, w); weight: (cls, n*c); bias: (cls,) -> (b, cls) f32."""
    b, n, c, h, w = x.shape
    cls_num = weight.shape[0]
    feat = n * c
    hw = h * w

    # ---- wrapper-side layout & padding (all free zero math) ------------
    x2 = x.reshape(b, feat, hw)                      # keep input dtype (bf16 ok)

    b_pad = _round_up(max(b, tb), tb)                # sublane-aligned batch
    cls_pad = _round_up(cls_num, 128)                # lane-dense output

    # Spatial tile: lane multiple, sized to ~a few MiB per step so the
    # pipeline double-buffers comfortably even on v7x's 64 MiB VMEM.
    itemsize = jnp.dtype(x.dtype).itemsize
    bytes_per_lane = tb * feat * itemsize
    thw_cap = max(128, (target_tile_bytes // bytes_per_lane) // 128 * 128)
    thw = min(thw_cap, _round_up(hw, 128))
    hw_pad = _round_up(hw, thw)

    x2 = jnp.pad(x2, ((0, b_pad - b), (0, 0), (0, hw_pad - hw)))
    wt = jnp.pad(weight.T.astype(jnp.float32),
                 ((0, 0), (0, cls_pad - cls_num)))                 # (F, CLS_pad)
    b2 = jnp.pad(bias.reshape(1, cls_num).astype(jnp.float32),
                 ((0, 0), (0, cls_pad - cls_num)))                 # (1, CLS_pad)

    grid = (b_pad // tb, hw_pad // thw)
    kernel = functools.partial(classify_kernel, inv_hw=1.0 / float(hw))

    out = pl.pallas_call(
        kernel,
        out_shape=jax.ShapeDtypeStruct((b_pad, cls_pad), jnp.float32),
        grid_spec=pltpu.PrefetchScalarGridSpec(
            num_scalar_prefetch=0,
            grid=grid,
            in_specs=[
                # Streamed operand: batch tile i, spatial tile k.
                pl.BlockSpec((tb, feat, thw), lambda i, k: (i, 0, k)),
                # Tiny constant operands: loaded once, VMEM-resident.
                pl.BlockSpec((feat, cls_pad), lambda i, k: (0, 0)),
                pl.BlockSpec((1, cls_pad), lambda i, k: (0, 0)),
            ],
            out_specs=pl.BlockSpec((tb, cls_pad), lambda i, k: (i, 0)),
            scratch_shapes=[pltpu.VMEM((tb, feat, thw), jnp.float32)],
        ),
        compiler_params=pltpu.CompilerParams(
            dimension_semantics=("parallel", "arbitrary"),
            vmem_limit_bytes=32 * 1024 * 1024,
        ),
    )(x2, wt, b2)

    # Drop batch / class padding outside the kernel.
    return out[:b, :cls_num]


def reference_forward(x, weight, bias):
    """Pure-JAX reference mirroring the PyTorch module."""
    b, n, c, h, w = x.shape
    pooled = jnp.mean(x, axis=(3, 4))            # (b, n, c)
    flat = pooled.reshape(b, n * c)              # (b, n*c)
    return flat @ weight.T + bias                # (b, cls_num)


if __name__ == "__main__":
    # Small shapes consistent with the module:
    #   feature_size = c = 8, fp_num = n = 4, cls_num = 5
    b, n, c, h, w = 2, 4, 8, 16, 16
    cls_num = 5
    in_features = c * n  # feature_size * fp_num

    key = jax.random.PRNGKey(0)
    kx, kw, kb = jax.random.split(key, 3)

    x = jax.random.normal(kx, (b, n, c, h, w), dtype=jnp.float32)

    # Deterministic nn.Linear-style init: U(-1/sqrt(in), 1/sqrt(in))
    bound = 1.0 / math.sqrt(in_features)
    weight = jax.random.uniform(
        kw, (cls_num, in_features), minval=-bound, maxval=bound,
        dtype=jnp.float32)
    bias = jax.random.uniform(
        kb, (cls_num,), minval=-bound, maxval=bound, dtype=jnp.float32)

    out = classify_forward(x, weight, bias)
    out = jax.block_until_ready(out)

    ref = reference_forward(x, weight, bias)
    assert out.shape == (b, cls_num), out.shape
    assert jnp.allclose(out, ref, atol=1e-5, rtol=1e-5), (
        f"max abs err {jnp.max(jnp.abs(out - ref))}")

    print("KERNEL_OK")
</pallas_src>

<mosaic_0001>
module attributes {stable_mosaic.version = 11 : i64} {
  func.func @classify_kernel(%arg0: i32, %arg1: i32, %arg2: memref<8x32x256xf32, #tpu.memory_space<vmem>>, %arg3: memref<32x128xf32, #tpu.memory_space<vmem>>, %arg4: memref<1x128xf32, #tpu.memory_space<vmem>>, %arg5: memref<8x128xf32, #tpu.memory_space<vmem>>, %arg6: memref<8x32x256xf32, #tpu.memory_space<vmem>>) attributes {dimension_semantics = [#tpu.dimension_semantics<parallel>, #tpu.dimension_semantics<arbitrary>], iteration_bounds = array<i64: 1, 1>, scalar_prefetch = 0 : i64, scratch_operands = 1 : i64, tpu.core_type = #tpu.core_type<tc>, window_params = [{transform_indices = @transform_0, window_bounds = array<i64: 8, 32, 256>}, {pipeline_mode = #tpu.pipeline_mode<synchronous>, transform_indices = @transform_1, window_bounds = array<i64: 32, 128>}, {pipeline_mode = #tpu.pipeline_mode<synchronous>, transform_indices = @transform_2, window_bounds = array<i64: 1, 128>}, {transform_indices = @transform_3, window_bounds = array<i64: 8, 128>}]} {
    %c0_i32 = arith.constant 0 : i32
    %0 = arith.cmpi eq, %arg1, %c0_i32 : i32
    %1 = arith.extui %0 : i1 to i32
    %c0_i32_0 = arith.constant 0 : i32
    %2 = arith.cmpi ne, %1, %c0_i32_0 : i32
    scf.if %2 {
      %cst = arith.constant 0.000000e+00 : f32
      %10 = vector.broadcast %cst : f32 to vector<8x32x256xf32>
      %c0_11 = arith.constant 0 : index
      %c0_12 = arith.constant 0 : index
      %c0_13 = arith.constant 0 : index
      %11 = vector.load %arg6[%c0_11, %c0_12, %c0_13] : memref<8x32x256xf32, #tpu.memory_space<vmem>>, vector<8x32x256xf32>
      tpu.vector_store %arg6[%c0_11, %c0_12, %c0_13], %10 {strides = array<i32>} : memref<8x32x256xf32, #tpu.memory_space<vmem>>, vector<8x32x256xf32>,
    } else {
    }
    %c0 = arith.constant 0 : index
    %c0_1 = arith.constant 0 : index
    %c0_2 = arith.constant 0 : index
    %3 = vector.load %arg6[%c0, %c0_1, %c0_2] : memref<8x32x256xf32, #tpu.memory_space<vmem>>, vector<8x32x256xf32>
    %c0_3 = arith.constant 0 : index
    %c0_4 = arith.constant 0 : index
    %c0_5 = arith.constant 0 : index
    %4 = vector.load %arg2[%c0_3, %c0_4, %c0_5] : memref<8x32x256xf32, #tpu.memory_space<vmem>>, vector<8x32x256xf32>
    %5 = arith.addf %3, %4 : vector<8x32x256xf32>
    %c0_6 = arith.constant 0 : index
    %c0_7 = arith.constant 0 : index
    %c0_8 = arith.constant 0 : index
    %6 = vector.load %arg6[%c0_6, %c0_7, %c0_8] : memref<8x32x256xf32, #tpu.memory_space<vmem>>, vector<8x32x256xf32>
    tpu.vector_store %arg6[%c0_6, %c0_7, %c0_8], %5 {strides = array<i32>} : memref<8x32x256xf32, #tpu.memory_space<vmem>>, vector<8x32x256xf32>,
    %c0_i32_9 = arith.constant 0 : i32
    %7 = arith.cmpi eq, %arg1, %c0_i32_9 : i32
    %8 = arith.extui %7 : i1 to i32
    %c0_i32_10 = arith.constant 0 : i32
    %9 = arith.cmpi ne, %8, %c0_i32_10 : i32
    scf.if %9 {
      %c0_11 = arith.constant 0 : index
      %c0_12 = arith.constant 0 : index
      %c0_13 = arith.constant 0 : index
      %10 = vector.load %arg6[%c0_11, %c0_12, %c0_13] : memref<8x32x256xf32, #tpu.memory_space<vmem>>, vector<8x32x256xf32>
      %cst = arith.constant dense<0.000000e+00> : vector<8x32xf32>
      %11 = vector.multi_reduction <add>, %10, %cst [2] : vector<8x32x256xf32> to vector<8x32xf32>
      %cst_14 = arith.constant 3.906250e-03 : f32
      %12 = vector.broadcast %cst_14 : f32 to vector<8x32xf32>
      %13 = arith.mulf %11, %12 : vector<8x32xf32>
      %c0_15 = arith.constant 0 : index
      %c0_16 = arith.constant 0 : index
      %14 = vector.load %arg3[%c0_15, %c0_16] : memref<32x128xf32, #tpu.memory_space<vmem>>, vector<32x128xf32>
      %cst_17 = arith.constant dense<0.000000e+00> : vector<8x128xf32>
      %15 = tpu.matmul %13, %14, %cst_17 {dimension_numbers = #tpu.dot_dimension_numbers<[1], [0], [0], [1], [0, 0, 1, 1], [], []>} : vector<8x32xf32>, vector<32x128xf32>, vector<8x128xf32> -> vector<8x128xf32>
      %c0_18 = arith.constant 0 : index
      %c0_19 = arith.constant 0 : index
      %16 = vector.load %arg4[%c0_18, %c0_19] : memref<1x128xf32, #tpu.memory_space<vmem>>, vector<1x128xf32>
      %17 = vector.broadcast %16 : vector<1x128xf32> to vector<8x128xf32>
      %18 = arith.addf %15, %17 : vector<8x128xf32>
      %c0_20 = arith.constant 0 : index
      %c0_21 = arith.constant 0 : index
      %19 = vector.load %arg5[%c0_20, %c0_21] : memref<8x128xf32, #tpu.memory_space<vmem>>, vector<8x128xf32>
      tpu.vector_store %arg5[%c0_20, %c0_21], %18 {strides = array<i32>} : memref<8x128xf32, #tpu.memory_space<vmem>>, vector<8x128xf32>,
    } else {
    }
    return
  }
  func.func @transform_0(%arg0: i32, %arg1: i32) -> (i32, i32, i32) {
    %c0_i32 = arith.constant 0 : i32
    %c0_i32_0 = arith.constant 0 : i32
    return %arg0, %c0_i32, %arg1 : i32, i32, i32
  }
  func.func @transform_1(%arg0: i32, %arg1: i32) -> (i32, i32) {
    %c0_i32 = arith.constant 0 : i32
    %c0_i32_0 = arith.constant 0 : i32
    %c0_i32_1 = arith.constant 0 : i32
    return %c0_i32, %c0_i32_0 : i32, i32
  }
  func.func @transform_2(%arg0: i32, %arg1: i32) -> (i32, i32) {
    %c0_i32 = arith.constant 0 : i32
    %c0_i32_0 = arith.constant 0 : i32
    %c0_i32_1 = arith.constant 0 : i32
    return %c0_i32, %c0_i32_0 : i32, i32
  }
  func.func @transform_3(%arg0: i32, %arg1: i32) -> (i32, i32) {
    %c0_i32 = arith.constant 0 : i32
    %c0_i32_0 = arith.constant 0 : i32
    return %arg0, %c0_i32 : i32, i32
  }
}

</mosaic_0001>

<llo_original>
// kernel: tpu_custom_call.1
$region0: #{tpu_custom_call.1}
  #allocation0 [shape = 'u32[]', space=smem, size = 0x4, offset = 0x4, fixed_abs, tag = 'smem constant byte address 0x4 - core index']
  #allocation1 [shape = 'u32[144,128]{1,0:T(1,128)}', space=vmem, size = 0x12000, scoped, tag = 'internal scratch']
  #allocation2 [shape = 'f32[8,32,256]{2,1,0:T(8,128)}', space=vmem, size = 0x40000, scoped, tag = 'scratch operand']
  %s0 = inlined_call_operand.hbm [shape: f32[8,32,256], index: 0, kind: input, shape index: {}]
  %s1 = inlined_call_operand.hbm [shape: f32[32,128], index: 1, kind: input, shape index: {}]
  %s2 = inlined_call_operand.vmem [shape: f32[1,128], index: 2, kind: input, shape index: {}]
  %s3 = inlined_call_operand.hbm [shape: f32[8,128], index: 3, kind: output, shape index: {}]
  %s4 = sld [smem:[#allocation0]]
  $region38: #{tpu_custom_call.1} parent=0
    _
  %s6 = ssub.s32 1, %s4
  %s7 = scalar_select 0, %s6, %s4
  $region1: #{tpu_custom_call.1} parent=0
    #allocation3 [shape = 'u8[262144]{0}', space=vmem, size = 0x40000, scoped, tag = 'input window, operand 0, single buffered']
    #allocation4 [shape = 's32[1]{0}', space=sflag, size = 0x4, scoped, tag = 'scoped memory for tpu_custom_call.1']
    #allocation5 [shape = 's32[1]{0}', space=sflag, size = 0x4, scoped, tag = 'scoped memory for tpu_custom_call.1']
    #allocation6 [shape = 'u8[16384]{0}', space=vmem, size = 0x4000, scoped, tag = 'input window, operand 1, single buffered']
    #allocation7 [shape = 's32[1]{0}', space=sflag, size = 0x4, scoped, tag = 'scoped memory for tpu_custom_call.1']
    #allocation8 [shape = 'u8[4096]{0}', space=vmem, size = 0x1000, scoped, tag = 'output window, operand 0, single buffered']
    %8 = vsyncpa [#allocation4], 0
    %9 = vsyncpa [#allocation7], 0
    %10 = vsyncpa [#allocation5], 0
    // Predicated region
    $region2: #{tpu_custom_call.1} parent=1 // pred_check
      _
    $region3: #{tpu_custom_call.1} parent=1 // pred_check_branch
      %12 = sbr.rel (0) target = $region5
    $region4: #{tpu_custom_call.1} parent=1 // pred_region
      %s14 = ssub.s32 8192, 8192
      %15 = vsyncadd [#allocation4], %s14
      %s16 = sshll.u32 [#allocation3], 4
      %s17 = int_to_ptr.vmem [resolvable:$true] %s16
      %22 = dma.hbm_to_vmem [thread:$0]  %s0, 8192, %s17, [#allocation4], 256, 256, 16
    $region5: #{tpu_custom_call.1} parent=1 // pred_fallthru
      _
    // Predicated region
    $region6: #{tpu_custom_call.1} parent=1 // pred_check
      _
    $region7: #{tpu_custom_call.1} parent=1 // pred_check_branch
      %24 = sbr.rel (0) target = $region9
    $region8: #{tpu_custom_call.1} parent=1 // pred_region
      %s26 = ssub.s32 512, 512
      %27 = vsyncadd [#allocation7], %s26
      %s28 = sshll.u32 [#allocation6], 4
      %s29 = int_to_ptr.vmem [resolvable:$true] %s28
      %34 = dma.hbm_to_vmem [thread:$0]  %s1, 512, %s29, [#allocation7], 128, 128, 8
    $region9: #{tpu_custom_call.1} parent=1 // pred_fallthru
      _
    // Predicated region
    $region10: #{tpu_custom_call.1} parent=1 // pred_check
      _
    $region11: #{tpu_custom_call.1} parent=1 // pred_check_branch
      %36 = sbr.rel (0) target = $region13
    $region12: #{tpu_custom_call.1} parent=1 // pred_region
      _
    $region13: #{tpu_custom_call.1} parent=1 // pred_fallthru
      _
    // Predicated region
    $region14: #{tpu_custom_call.1} parent=1 // pred_check
      _
    $region15: #{tpu_custom_call.1} parent=1 // pred_check_branch
      %38 = sbr.rel (0) target = $region17
    $region16: #{tpu_custom_call.1} parent=1 // pred_region
      %39 = dma.done [#allocation4], 8192
    $region17: #{tpu_custom_call.1} parent=1 // pred_fallthru
      _
    // Predicated region
    $region18: #{tpu_custom_call.1} parent=1 // pred_check
      _
    $region19: #{tpu_custom_call.1} parent=1 // pred_check_branch
      %41 = sbr.rel (0) target = $region21
    $region20: #{tpu_custom_call.1} parent=1 // pred_region
      %42 = dma.done [#allocation7], 512
    $region21: #{tpu_custom_call.1} parent=1 // pred_fallthru
      _
    %p43 = scmp.eq.s32.totalorder 0, 0
    // Predicated region
    $region22: #{tpu_custom_call.1} parent=1 // pred_check
      %p44 = pneg %p43
    $region23: #{tpu_custom_call.1} parent=1 // pred_check_branch
      %46 = sbr.rel (%p44) target = $region25
    $region24: #{tpu_custom_call.1} parent=1 // pred_region
      %47 = vst [vmem:[#allocation2] sm:$0xff] 0.0
      %48 = vst [vmem:[#allocation2 + $0x8] sm:$0xff] 0.0
      %49 = vst [vmem:[#allocation2 + $0x10] sm:$0xff] 0.0
      %50 = vst [vmem:[#allocation2 + $0x18] sm:$0xff] 0.0
      %51 = vst [vmem:[#allocation2 + $0x20] sm:$0xff] 0.0
      %52 = vst [vmem:[#allocation2 + $0x28] sm:$0xff] 0.0
      %53 = vst [vmem:[#allocation2 + $0x30] sm:$0xff] 0.0
      %54 = vst [vmem:[#allocation2 + $0x38] sm:$0xff] 0.0
      %55 = vst [vmem:[#allocation2 + $0x40] sm:$0xff] 0.0
      %56 = vst [vmem:[#allocation2 + $0x48] sm:$0xff] 0.0
      %57 = vst [vmem:[#allocation2 + $0x50] sm:$0xff] 0.0
      %58 = vst [vmem:[#allocation2 + $0x58] sm:$0xff] 0.0
      %59 = vst [vmem:[#allocation2 + $0x60] sm:$0xff] 0.0
      %60 = vst [vmem:[#allocation2 + $0x68] sm:$0xff] 0.0
      %61 = vst [vmem:[#allocation2 + $0x70] sm:$0xff] 0.0
      %62 = vst [vmem:[#allocation2 + $0x78] sm:$0xff] 0.0
      %63 = vst [vmem:[#allocation2 + $0x80] sm:$0xff] 0.0
      %64 = vst [vmem:[#allocation2 + $0x88] sm:$0xff] 0.0
      %65 = vst [vmem:[#allocation2 + $0x90] sm:$0xff] 0.0
      %66 = vst [vmem:[#allocation2 + $0x98] sm:$0xff] 0.0
      %67 = vst [vmem:[#allocation2 + $0xa0] sm:$0xff] 0.0
      %68 = vst [vmem:[#allocation2 + $0xa8] sm:$0xff] 0.0
      %69 = vst [vmem:[#allocation2 + $0xb0] sm:$0xff] 0.0
      %70 = vst [vmem:[#allocation2 + $0xb8] sm:$0xff] 0.0
      %71 = vst [vmem:[#allocation2 + $0xc0] sm:$0xff] 0.0
      %72 = vst [vmem:[#allocation2 + $0xc8] sm:$0xff] 0.0
      %73 = vst [vmem:[#allocation2 + $0xd0] sm:$0xff] 0.0
      %74 = vst [vmem:[#allocation2 + $0xd8] sm:$0xff] 0.0
      %75 = vst [vmem:[#allocation2 + $0xe0] sm:$0xff] 0.0
      %76 = vst [vmem:[#allocation2 + $0xe8] sm:$0xff] 0.0
      %77 = vst [vmem:[#allocation2 + $0xf0] sm:$0xff] 0.0
      %78 = vst [vmem:[#allocation2 + $0xf8] sm:$0xff] 0.0
      %79 = vst [vmem:[#allocation2 + $0x100] sm:$0xff] 0.0
      %80 = vst [vmem:[#allocation2 + $0x108] sm:$0xff] 0.0
      %81 = vst [vmem:[#allocation2 + $0x110] sm:$0xff] 0.0
      %82 = vst [vmem:[#allocation2 + $0x118] sm:$0xff] 0.0
      %83 = vst [vmem:[#allocation2 + $0x120] sm:$0xff] 0.0
      %84 = vst [vmem:[#allocation2 + $0x128] sm:$0xff] 0.0
      %85 = vst [vmem:[#allocation2 + $0x130] sm:$0xff] 0.0
      %86 = vst [vmem:[#allocation2 + $0x138] sm:$0xff] 0.0
      %87 = vst [vmem:[#allocation2 + $0x140] sm:$0xff] 0.0
      %88 = vst [vmem:[#allocation2 + $0x148] sm:$0xff] 0.0
      %89 = vst [vmem:[#allocation2 + $0x150] sm:$0xff] 0.0
      %90 = vst [vmem:[#allocation2 + $0x158] sm:$0xff] 0.0
      %91 = vst [vmem:[#allocation2 + $0x160] sm:$0xff] 0.0
      %92 = vst [vmem:[#allocation2 + $0x168] sm:$0xff] 0.0
      %93 = vst [vmem:[#allocation2 + $0x170] sm:$0xff] 0.0
      %94 = vst [vmem:[#allocation2 + $0x178] sm:$0xff] 0.0
      %95 = vst [vmem:[#allocation2 + $0x180] sm:$0xff] 0.0
      %96 = vst [vmem:[#allocation2 + $0x188] sm:$0xff] 0.0
      %97 = vst [vmem:[#allocation2 + $0x190] sm:$0xff] 0.0
      %98 = vst [vmem:[#allocation2 + $0x198] sm:$0xff] 0.0
      %99 = vst [vmem:[#allocation2 + $0x1a0] sm:$0xff] 0.0
      %100 = vst [vmem:[#allocation2 + $0x1a8] sm:$0xff] 0.0
      %101 = vst [vmem:[#allocation2 + $0x1b0] sm:$0xff] 0.0
      %102 = vst [vmem:[#allocation2 + $0x1b8] sm:$0xff] 0.0
      %103 = vst [vmem:[#allocation2 + $0x1c0] sm:$0xff] 0.0
      %104 = vst [vmem:[#allocation2 + $0x1c8] sm:$0xff] 0.0
      %105 = vst [vmem:[#allocation2 + $0x1d0] sm:$0xff] 0.0
      %106 = vst [vmem:[#allocation2 + $0x1d8] sm:$0xff] 0.0
      %107 = vst [vmem:[#allocation2 + $0x1e0] sm:$0xff] 0.0
      %108 = vst [vmem:[#allocation2 + $0x1e8] sm:$0xff] 0.0
      %109 = vst [vmem:[#allocation2 + $0x1f0] sm:$0xff] 0.0
      %110 = vst [vmem:[#allocation2 + $0x1f8] sm:$0xff] 0.0
    $region25: #{tpu_custom_call.1} parent=1 // pred_fallthru
      _
    %v111 = vld [vmem:[#allocation2] sm:$0xff]
    %v112 = vld [vmem:[#allocation2 + $0x8] sm:$0xff]
    %v113 = vld [vmem:[#allocation2 + $0x10] sm:$0xff]
    %v114 = vld [vmem:[#allocation2 + $0x18] sm:$0xff]
    %v115 = vld [vmem:[#allocation2 + $0x20] sm:$0xff]
    %v116 = vld [vmem:[#allocation2 + $0x28] sm:$0xff]
    %v117 = vld [vmem:[#allocation2 + $0x30] sm:$0xff]
    %v118 = vld [vmem:[#allocation2 + $0x38] sm:$0xff]
    %v119 = vld [vmem:[#allocation2 + $0x40] sm:$0xff]
    %v120 = vld [vmem:[#allocation2 + $0x48] sm:$0xff]
    %v121 = vld [vmem:[#allocation2 + $0x50] sm:$0xff]
    %v122 = vld [vmem:[#allocation2 + $0x58] sm:$0xff]
    %v123 = vld [vmem:[#allocation2 + $0x60] sm:$0xff]
    %v124 = vld [vmem:[#allocation2 + $0x68] sm:$0xff]
    %v125 = vld [vmem:[#allocation2 + $0x70] sm:$0xff]
    %v126 = vld [vmem:[#allocation2 + $0x78] sm:$0xff]
    %v127 = vld [vmem:[#allocation2 + $0x80] sm:$0xff]
    %v128 = vld [vmem:[#allocation2 + $0x88] sm:$0xff]
    %v129 = vld [vmem:[#allocation2 + $0x90] sm:$0xff]
    %v130 = vld [vmem:[#allocation2 + $0x98] sm:$0xff]
    %v131 = vld [vmem:[#allocation2 + $0xa0] sm:$0xff]
    %v132 = vld [vmem:[#allocation2 + $0xa8] sm:$0xff]
    %v133 = vld [vmem:[#allocation2 + $0xb0] sm:$0xff]
    %v134 = vld [vmem:[#allocation2 + $0xb8] sm:$0xff]
    %v135 = vld [vmem:[#allocation2 + $0xc0] sm:$0xff]
    %v136 = vld [vmem:[#allocation2 + $0xc8] sm:$0xff]
    %v137 = vld [vmem:[#allocation2 + $0xd0] sm:$0xff]
    %v138 = vld [vmem:[#allocation2 + $0xd8] sm:$0xff]
    %v139 = vld [vmem:[#allocation2 + $0xe0] sm:$0xff]
    %v140 = vld [vmem:[#allocation2 + $0xe8] sm:$0xff]
    %v141 = vld [vmem:[#allocation2 + $0xf0] sm:$0xff]
    %v142 = vld [vmem:[#allocation2 + $0xf8] sm:$0xff]
    %v143 = vld [vmem:[#allocation2 + $0x100] sm:$0xff]
    %v144 = vld [vmem:[#allocation2 + $0x108] sm:$0xff]
    %v145 = vld [vmem:[#allocation2 + $0x110] sm:$0xff]
    %v146 = vld [vmem:[#allocation2 + $0x118] sm:$0xff]
    %v147 = vld [vmem:[#allocation2 + $0x120] sm:$0xff]
    %v148 = vld [vmem:[#allocation2 + $0x128] sm:$0xff]
    %v149 = vld [vmem:[#allocation2 + $0x130] sm:$0xff]
    %v150 = vld [vmem:[#allocation2 + $0x138] sm:$0xff]
    %v151 = vld [vmem:[#allocation2 + $0x140] sm:$0xff]
    %v152 = vld [vmem:[#allocation2 + $0x148] sm:$0xff]
    %v153 = vld [vmem:[#allocation2 + $0x150] sm:$0xff]
    %v154 = vld [vmem:[#allocation2 + $0x158] sm:$0xff]
    %v155 = vld [vmem:[#allocation2 + $0x160] sm:$0xff]
    %v156 = vld [vmem:[#allocation2 + $0x168] sm:$0xff]
    %v157 = vld [vmem:[#allocation2 + $0x170] sm:$0xff]
    %v158 = vld [vmem:[#allocation2 + $0x178] sm:$0xff]
    %v159 = vld [vmem:[#allocation2 + $0x180] sm:$0xff]
    %v160 = vld [vmem:[#allocation2 + $0x188] sm:$0xff]
    %v161 = vld [vmem:[#allocation2 + $0x190] sm:$0xff]
    %v162 = vld [vmem:[#allocation2 + $0x198] sm:$0xff]
    %v163 = vld [vmem:[#allocation2 + $0x1a0] sm:$0xff]
    %v164 = vld [vmem:[#allocation2 + $0x1a8] sm:$0xff]
    %v165 = vld [vmem:[#allocation2 + $0x1b0] sm:$0xff]
    %v166 = vld [vmem:[#allocation2 + $0x1b8] sm:$0xff]
    %v167 = vld [vmem:[#allocation2 + $0x1c0] sm:$0xff]
    %v168 = vld [vmem:[#allocation2 + $0x1c8] sm:$0xff]
    %v169 = vld [vmem:[#allocation2 + $0x1d0] sm:$0xff]
    %v170 = vld [vmem:[#allocation2 + $0x1d8] sm:$0xff]
    %v171 = vld [vmem:[#allocation2 + $0x1e0] sm:$0xff]
    %v172 = vld [vmem:[#allocation2 + $0x1e8] sm:$0xff]
    %v173 = vld [vmem:[#allocation2 + $0x1f0] sm:$0xff]
    %v174 = vld [vmem:[#allocation2 + $0x1f8] sm:$0xff]
    %v175 = vld [vmem:[#allocation3] sm:$0xff]
    %v176 = vld [vmem:[#allocation3 + $0x8] sm:$0xff]
    %v177 = vld [vmem:[#allocation3 + $0x10] sm:$0xff]
    %v178 = vld [vmem:[#allocation3 + $0x18] sm:$0xff]
    %v179 = vld [vmem:[#allocation3 + $0x20] sm:$0xff]
    %v180 = vld [vmem:[#allocation3 + $0x28] sm:$0xff]
    %v181 = vld [vmem:[#allocation3 + $0x30] sm:$0xff]
    %v182 = vld [vmem:[#allocation3 + $0x38] sm:$0xff]
    %v183 = vld [vmem:[#allocation3 + $0x40] sm:$0xff]
    %v184 = vld [vmem:[#allocation3 + $0x48] sm:$0xff]
    %v185 = vld [vmem:[#allocation3 + $0x50] sm:$0xff]
    %v186 = vld [vmem:[#allocation3 + $0x58] sm:$0xff]
    %v187 = vld [vmem:[#allocation3 + $0x60] sm:$0xff]
    %v188 = vld [vmem:[#allocation3 + $0x68] sm:$0xff]
    %v189 = vld [vmem:[#allocation3 + $0x70] sm:$0xff]
    %v190 = vld [vmem:[#allocation3 + $0x78] sm:$0xff]
    %v191 = vld [vmem:[#allocation3 + $0x80] sm:$0xff]
    %v192 = vld [vmem:[#allocation3 + $0x88] sm:$0xff]
    %v193 = vld [vmem:[#allocation3 + $0x90] sm:$0xff]
    %v194 = vld [vmem:[#allocation3 + $0x98] sm:$0xff]
    %v195 = vld [vmem:[#allocation3 + $0xa0] sm:$0xff]
    %v196 = vld [vmem:[#allocation3 + $0xa8] sm:$0xff]
    %v197 = vld [vmem:[#allocation3 + $0xb0] sm:$0xff]
    %v198 = vld [vmem:[#allocation3 + $0xb8] sm:$0xff]
    %v199 = vld [vmem:[#allocation3 + $0xc0] sm:$0xff]
    %v200 = vld [vmem:[#allocation3 + $0xc8] sm:$0xff]
    %v201 = vld [vmem:[#allocation3 + $0xd0] sm:$0xff]
    %v202 = vld [vmem:[#allocation3 + $0xd8] sm:$0xff]
    %v203 = vld [vmem:[#allocation3 + $0xe0] sm:$0xff]
    %v204 = vld [vmem:[#allocation3 + $0xe8] sm:$0xff]
    %v205 = vld [vmem:[#allocation3 + $0xf0] sm:$0xff]
    %v206 = vld [vmem:[#allocation3 + $0xf8] sm:$0xff]
    %v207 = vld [vmem:[#allocation3 + $0x100] sm:$0xff]
    %v208 = vld [vmem:[#allocation3 + $0x108] sm:$0xff]
    %v209 = vld [vmem:[#allocation3 + $0x110] sm:$0xff]
    %v210 = vld [vmem:[#allocation3 + $0x118] sm:$0xff]
    %v211 = vld [vmem:[#allocation3 + $0x120] sm:$0xff]
    %v212 = vld [vmem:[#allocation3 + $0x128] sm:$0xff]
    %v213 = vld [vmem:[#allocation3 + $0x130] sm:$0xff]
    %v214 = vld [vmem:[#allocation3 + $0x138] sm:$0xff]
    %v215 = vld [vmem:[#allocation3 + $0x140] sm:$0xff]
    %v216 = vld [vmem:[#allocation3 + $0x148] sm:$0xff]
    %v217 = vld [vmem:[#allocation3 + $0x150] sm:$0xff]
    %v218 = vld [vmem:[#allocation3 + $0x158] sm:$0xff]
    %v219 = vld [vmem:[#allocation3 + $0x160] sm:$0xff]
    %v220 = vld [vmem:[#allocation3 + $0x168] sm:$0xff]
    %v221 = vld [vmem:[#allocation3 + $0x170] sm:$0xff]
    %v222 = vld [vmem:[#allocation3 + $0x178] sm:$0xff]
    %v223 = vld [vmem:[#allocation3 + $0x180] sm:$0xff]
    %v224 = vld [vmem:[#allocation3 + $0x188] sm:$0xff]
    %v225 = vld [vmem:[#allocation3 + $0x190] sm:$0xff]
    %v226 = vld [vmem:[#allocation3 + $0x198] sm:$0xff]
    %v227 = vld [vmem:[#allocation3 + $0x1a0] sm:$0xff]
    %v228 = vld [vmem:[#allocation3 + $0x1a8] sm:$0xff]
    %v229 = vld [vmem:[#allocation3 + $0x1b0] sm:$0xff]
    %v230 = vld [vmem:[#allocation3 + $0x1b8] sm:$0xff]
    %v231 = vld [vmem:[#allocation3 + $0x1c0] sm:$0xff]
    %v232 = vld [vmem:[#allocation3 + $0x1c8] sm:$0xff]
    %v233 = vld [vmem:[#allocation3 + $0x1d0] sm:$0xff]
    %v234 = vld [vmem:[#allocation3 + $0x1d8] sm:$0xff]
    %v235 = vld [vmem:[#allocation3 + $0x1e0] sm:$0xff]
    %v236 = vld [vmem:[#allocation3 + $0x1e8] sm:$0xff]
    %v237 = vld [vmem:[#allocation3 + $0x1f0] sm:$0xff]
    %v238 = vld [vmem:[#allocation3 + $0x1f8] sm:$0xff]
    %v239 = vadd.f32 %v111, %v175
    %v240 = vadd.f32 %v112, %v176
    %v241 = vadd.f32 %v113, %v177
    %v242 = vadd.f32 %v114, %v178
    %v243 = vadd.f32 %v115, %v179
    %v244 = vadd.f32 %v116, %v180
    %v245 = vadd.f32 %v117, %v181
    %v246 = vadd.f32 %v118, %v182
    %v247 = vadd.f32 %v119, %v183
    %v248 = vadd.f32 %v120, %v184
    %v249 = vadd.f32 %v121, %v185
    %v250 = vadd.f32 %v122, %v186
    %v251 = vadd.f32 %v123, %v187
    %v252 = vadd.f32 %v124, %v188
    %v253 = vadd.f32 %v125, %v189
    %v254 = vadd.f32 %v126, %v190
    %v255 = vadd.f32 %v127, %v191
    %v256 = vadd.f32 %v128, %v192
    %v257 = vadd.f32 %v129, %v193
    %v258 = vadd.f32 %v130, %v194
    %v259 = vadd.f32 %v131, %v195
    %v260 = vadd.f32 %v132, %v196
    %v261 = vadd.f32 %v133, %v197
    %v262 = vadd.f32 %v134, %v198
    %v263 = vadd.f32 %v135, %v199
    %v264 = vadd.f32 %v136, %v200
    %v265 = vadd.f32 %v137, %v201
    %v266 = vadd.f32 %v138, %v202
    %v267 = vadd.f32 %v139, %v203
    %v268 = vadd.f32 %v140, %v204
    %v269 = vadd.f32 %v141, %v205
    %v270 = vadd.f32 %v142, %v206
    %v271 = vadd.f32 %v143, %v207
    %v272 = vadd.f32 %v144, %v208
    %v273 = vadd.f32 %v145, %v209
    %v274 = vadd.f32 %v146, %v210
    %v275 = vadd.f32 %v147, %v211
    %v276 = vadd.f32 %v148, %v212
    %v277 = vadd.f32 %v149, %v213
    %v278 = vadd.f32 %v150, %v214
    %v279 = vadd.f32 %v151, %v215
    %v280 = vadd.f32 %v152, %v216
    %v281 = vadd.f32 %v153, %v217
    %v282 = vadd.f32 %v154, %v218
    %v283 = vadd.f32 %v155, %v219
    %v284 = vadd.f32 %v156, %v220
    %v285 = vadd.f32 %v157, %v221
    %v286 = vadd.f32 %v158, %v222
    %v287 = vadd.f32 %v159, %v223
    %v288 = vadd.f32 %v160, %v224
    %v289 = vadd.f32 %v161, %v225
    %v290 = vadd.f32 %v162, %v226
    %v291 = vadd.f32 %v163, %v227
    %v292 = vadd.f32 %v164, %v228
    %v293 = vadd.f32 %v165, %v229
    %v294 = vadd.f32 %v166, %v230
    %v295 = vadd.f32 %v167, %v231
    %v296 = vadd.f32 %v168, %v232
    %v297 = vadd.f32 %v169, %v233
    %v298 = vadd.f32 %v170, %v234
    %v299 = vadd.f32 %v171, %v235
    %v300 = vadd.f32 %v172, %v236
    %v301 = vadd.f32 %v173, %v237
    %v302 = vadd.f32 %v174, %v238
    %303 = vst [vmem:[#allocation2] sm:$0xff] %v239
    %304 = vst [vmem:[#allocation2 + $0x8] sm:$0xff] %v240
    %305 = vst [vmem:[#allocation2 + $0x10] sm:$0xff] %v241
    %306 = vst [vmem:[#allocation2 + $0x18] sm:$0xff] %v242
    %307 = vst [vmem:[#allocation2 + $0x20] sm:$0xff] %v243
    %308 = vst [vmem:[#allocation2 + $0x28] sm:$0xff] %v244
    %309 = vst [vmem:[#allocation2 + $0x30] sm:$0xff] %v245
    %310 = vst [vmem:[#allocation2 + $0x38] sm:$0xff] %v246
    %311 = vst [vmem:[#allocation2 + $0x40] sm:$0xff] %v247
    %312 = vst [vmem:[#allocation2 + $0x48] sm:$0xff] %v248
    %313 = vst [vmem:[#allocation2 + $0x50] sm:$0xff] %v249
    %314 = vst [vmem:[#allocation2 + $0x58] sm:$0xff] %v250
    %315 = vst [vmem:[#allocation2 + $0x60] sm:$0xff] %v251
    %316 = vst [vmem:[#allocation2 + $0x68] sm:$0xff] %v252
    %317 = vst [vmem:[#allocation2 + $0x70] sm:$0xff] %v253
    %318 = vst [vmem:[#allocation2 + $0x78] sm:$0xff] %v254
    %319 = vst [vmem:[#allocation2 + $0x80] sm:$0xff] %v255
    %320 = vst [vmem:[#allocation2 + $0x88] sm:$0xff] %v256
    %321 = vst [vmem:[#allocation2 + $0x90] sm:$0xff] %v257
    %322 = vst [vmem:[#allocation2 + $0x98] sm:$0xff] %v258
    %323 = vst [vmem:[#allocation2 + $0xa0] sm:$0xff] %v259
    %324 = vst [vmem:[#allocation2 + $0xa8] sm:$0xff] %v260
    %325 = vst [vmem:[#allocation2 + $0xb0] sm:$0xff] %v261
    %326 = vst [vmem:[#allocation2 + $0xb8] sm:$0xff] %v262
    %327 = vst [vmem:[#allocation2 + $0xc0] sm:$0xff] %v263
    %328 = vst [vmem:[#allocation2 + $0xc8] sm:$0xff] %v264
    %329 = vst [vmem:[#allocation2 + $0xd0] sm:$0xff] %v265
    %330 = vst [vmem:[#allocation2 + $0xd8] sm:$0xff] %v266
    %331 = vst [vmem:[#allocation2 + $0xe0] sm:$0xff] %v267
    %332 = vst [vmem:[#allocation2 + $0xe8] sm:$0xff] %v268
    %333 = vst [vmem:[#allocation2 + $0xf0] sm:$0xff] %v269
    %334 = vst [vmem:[#allocation2 + $0xf8] sm:$0xff] %v270
    %335 = vst [vmem:[#allocation2 + $0x100] sm:$0xff] %v271
    %336 = vst [vmem:[#allocation2 + $0x108] sm:$0xff] %v272
    %337 = vst [vmem:[#allocation2 + $0x110] sm:$0xff] %v273
    %338 = vst [vmem:[#allocation2 + $0x118] sm:$0xff] %v274
    %339 = vst [vmem:[#allocation2 + $0x120] sm:$0xff] %v275
    %340 = vst [vmem:[#allocation2 + $0x128] sm:$0xff] %v276
    %341 = vst [vmem:[#allocation2 + $0x130] sm:$0xff] %v277
    %342 = vst [vmem:[#allocation2 + $0x138] sm:$0xff] %v278
    %343 = vst [vmem:[#allocation2 + $0x140] sm:$0xff] %v279
    %344 = vst [vmem:[#allocation2 + $0x148] sm:$0xff] %v280
    %345 = vst [vmem:[#allocation2 + $0x150] sm:$0xff] %v281
    %346 = vst [vmem:[#allocation2 + $0x158] sm:$0xff] %v282
    %347 = vst [vmem:[#allocation2 + $0x160] sm:$0xff] %v283
    %348 = vst [vmem:[#allocation2 + $0x168] sm:$0xff] %v284
    %349 = vst [vmem:[#allocation2 + $0x170] sm:$0xff] %v285
    %350 = vst [vmem:[#allocation2 + $0x178] sm:$0xff] %v286
    %351 = vst [vmem:[#allocation2 + $0x180] sm:$0xff] %v287
    %352 = vst [vmem:[#allocation2 + $0x188] sm:$0xff] %v288
    %353 = vst [vmem:[#allocation2 + $0x190] sm:$0xff] %v289
    %354 = vst [vmem:[#allocation2 + $0x198] sm:$0xff] %v290
    %355 = vst [vmem:[#allocation2 + $0x1a0] sm:$0xff] %v291
    %356 = vst [vmem:[#allocation2 + $0x1a8] sm:$0xff] %v292
    %357 = vst [vmem:[#allocation2 + $0x1b0] sm:$0xff] %v293
    %358 = vst [vmem:[#allocation2 + $0x1b8] sm:$0xff] %v294
    %359 = vst [vmem:[#allocation2 + $0x1c0] sm:$0xff] %v295
    %360 = vst [vmem:[#allocation2 + $0x1c8] sm:$0xff] %v296
    %361 = vst [vmem:[#allocation2 + $0x1d0] sm:$0xff] %v297
    %362 = vst [vmem:[#allocation2 + $0x1d8] sm:$0xff] %v298
    %363 = vst [vmem:[#allocation2 + $0x1e0] sm:$0xff] %v299
    %364 = vst [vmem:[#allocation2 + $0x1e8] sm:$0xff] %v300
    %365 = vst [vmem:[#allocation2 + $0x1f0] sm:$0xff] %v301
    %366 = vst [vmem:[#allocation2 + $0x1f8] sm:$0xff] %v302
    // Predicated region
    $region26: #{tpu_custom_call.1} parent=1 // pred_check
      %p367 = pneg %p43
    $region27: #{tpu_custom_call.1} parent=1 // pred_check_branch
      %369 = sbr.rel (%p367) target = $region29
    $region28: #{tpu_custom_call.1} parent=1 // pred_region
      %v370 = vld [vmem:[#allocation2] sm:$0xff]
      %v371 = vld [vmem:[#allocation2 + $0x8] sm:$0xff]
      %v372 = vld [vmem:[#allocation2 + $0x10] sm:$0xff]
      %v373 = vld [vmem:[#allocation2 + $0x18] sm:$0xff]
      %v374 = vld [vmem:[#allocation2 + $0x20] sm:$0xff]
      %v375 = vld [vmem:[#allocation2 + $0x28] sm:$0xff]
      %v376 = vld [vmem:[#allocation2 + $0x30] sm:$0xff]
      %v377 = vld [vmem:[#allocation2 + $0x38] sm:$0xff]
      %v378 = vld [vmem:[#allocation2 + $0x40] sm:$0xff]
      %v379 = vld [vmem:[#allocation2 + $0x48] sm:$0xff]
      %v380 = vld [vmem:[#allocation2 + $0x50] sm:$0xff]
      %v381 = vld [vmem:[#allocation2 + $0x58] sm:$0xff]
      %v382 = vld [vmem:[#allocation2 + $0x60] sm:$0xff]
      %v383 = vld [vmem:[#allocation2 + $0x68] sm:$0xff]
      %v384 = vld [vmem:[#allocation2 + $0x70] sm:$0xff]
      %v385 = vld [vmem:[#allocation2 + $0x78] sm:$0xff]
      %v386 = vld [vmem:[#allocation2 + $0x80] sm:$0xff]
      %v387 = vld [vmem:[#allocation2 + $0x88] sm:$0xff]
      %v388 = vld [vmem:[#allocation2 + $0x90] sm:$0xff]
      %v389 = vld [vmem:[#allocation2 + $0x98] sm:$0xff]
      %v390 = vld [vmem:[#allocation2 + $0xa0] sm:$0xff]
      %v391 = vld [vmem:[#allocation2 + $0xa8] sm:$0xff]
      %v392 = vld [vmem:[#allocation2 + $0xb0] sm:$0xff]
      %v393 = vld [vmem:[#allocation2 + $0xb8] sm:$0xff]
      %v394 = vld [vmem:[#allocation2 + $0xc0] sm:$0xff]
      %v395 = vld [vmem:[#allocation2 + $0xc8] sm:$0xff]
      %v396 = vld [vmem:[#allocation2 + $0xd0] sm:$0xff]
      %v397 = vld [vmem:[#allocation2 + $0xd8] sm:$0xff]
      %v398 = vld [vmem:[#allocation2 + $0xe0] sm:$0xff]
      %v399 = vld [vmem:[#allocation2 + $0xe8] sm:$0xff]
      %v400 = vld [vmem:[#allocation2 + $0xf0] sm:$0xff]
      %v401 = vld [vmem:[#allocation2 + $0xf8] sm:$0xff]
      %v402 = vld [vmem:[#allocation2 + $0x100] sm:$0xff]
      %v403 = vld [vmem:[#allocation2 + $0x108] sm:$0xff]
      %v404 = vld [vmem:[#allocation2 + $0x110] sm:$0xff]
      %v405 = vld [vmem:[#allocation2 + $0x118] sm:$0xff]
      %v406 = vld [vmem:[#allocation2 + $0x120] sm:$0xff]
      %v407 = vld [vmem:[#allocation2 + $0x128] sm:$0xff]
      %v408 = vld [vmem:[#allocation2 + $0x130] sm:$0xff]
      %v409 = vld [vmem:[#allocation2 + $0x138] sm:$0xff]
      %v410 = vld [vmem:[#allocation2 + $0x140] sm:$0xff]
      %v411 = vld [vmem:[#allocation2 + $0x148] sm:$0xff]
      %v412 = vld [vmem:[#allocation2 + $0x150] sm:$0xff]
      %v413 = vld [vmem:[#allocation2 + $0x158] sm:$0xff]
      %v414 = vld [vmem:[#allocation2 + $0x160] sm:$0xff]
      %v415 = vld [vmem:[#allocation2 + $0x168] sm:$0xff]
      %v416 = vld [vmem:[#allocation2 + $0x170] sm:$0xff]
      %v417 = vld [vmem:[#allocation2 + $0x178] sm:$0xff]
      %v418 = vld [vmem:[#allocation2 + $0x180] sm:$0xff]
      %v419 = vld [vmem:[#allocation2 + $0x188] sm:$0xff]
      %v420 = vld [vmem:[#allocation2 + $0x190] sm:$0xff]
      %v421 = vld [vmem:[#allocation2 + $0x198] sm:$0xff]
      %v422 = vld [vmem:[#allocation2 + $0x1a0] sm:$0xff]
      %v423 = vld [vmem:[#allocation2 + $0x1a8] sm:$0xff]
      %v424 = vld [vmem:[#allocation2 + $0x1b0] sm:$0xff]
      %v425 = vld [vmem:[#allocation2 + $0x1b8] sm:$0xff]
      %v426 = vld [vmem:[#allocation2 + $0x1c0] sm:$0xff]
      %v427 = vld [vmem:[#allocation2 + $0x1c8] sm:$0xff]
      %v428 = vld [vmem:[#allocation2 + $0x1d0] sm:$0xff]
      %v429 = vld [vmem:[#allocation2 + $0x1d8] sm:$0xff]
      %v430 = vld [vmem:[#allocation2 + $0x1e0] sm:$0xff]
      %v431 = vld [vmem:[#allocation2 + $0x1e8] sm:$0xff]
      %v432 = vld [vmem:[#allocation2 + $0x1f0] sm:$0xff]
      %v433 = vld [vmem:[#allocation2 + $0x1f8] sm:$0xff]
      %v434 = vadd.f32 %v370, %v371
      %435 = vadd.xlane.f32.xlu0 %v434
      %v436 = vpop.xlane.xlu0 %435
      %v437 = vadd.f32 %v372, %v373
      %438 = vadd.xlane.f32.xlu0 %v437
      %v439 = vpop.xlane.xlu0 %438
      %v440 = vadd.f32 %v374, %v375
      %441 = vadd.xlane.f32.xlu0 %v440
      %v442 = vpop.xlane.xlu0 %441
      %v443 = vadd.f32 %v376, %v377
      %444 = vadd.xlane.f32.xlu0 %v443
      %v445 = vpop.xlane.xlu0 %444
      %v446 = vadd.f32 %v378, %v379
      %447 = vadd.xlane.f32.xlu0 %v446
      %v448 = vpop.xlane.xlu0 %447
      %v449 = vadd.f32 %v380, %v381
      %450 = vadd.xlane.f32.xlu0 %v449
      %v451 = vpop.xlane.xlu0 %450
      %v452 = vadd.f32 %v382, %v383
      %453 = vadd.xlane.f32.xlu0 %v452
      %v454 = vpop.xlane.xlu0 %453
      %v455 = vadd.f32 %v384, %v385
      %456 = vadd.xlane.f32.xlu0 %v455
      %v457 = vpop.xlane.xlu0 %456
      %v458 = vadd.f32 %v386, %v387
      %459 = vadd.xlane.f32.xlu0 %v458
      %v460 = vpop.xlane.xlu0 %459
      %v461 = vadd.f32 %v388, %v389
      %462 = vadd.xlane.f32.xlu0 %v461
      %v463 = vpop.xlane.xlu0 %462
      %v464 = vadd.f32 %v390, %v391
      %465 = vadd.xlane.f32.xlu0 %v464
      %v466 = vpop.xlane.xlu0 %465
      %v467 = vadd.f32 %v392, %v393
      %468 = vadd.xlane.f32.xlu0 %v467
      %v469 = vpop.xlane.xlu0 %468
      %v470 = vadd.f32 %v394, %v395
      %471 = vadd.xlane.f32.xlu0 %v470
      %v472 = vpop.xlane.xlu0 %471
      %v473 = vadd.f32 %v396, %v397
      %474 = vadd.xlane.f32.xlu0 %v473
      %v475 = vpop.xlane.xlu0 %474
      %v476 = vadd.f32 %v398, %v399
      %477 = vadd.xlane.f32.xlu0 %v476
      %v478 = vpop.xlane.xlu0 %477
      %v479 = vadd.f32 %v400, %v401
      %480 = vadd.xlane.f32.xlu0 %v479
      %v481 = vpop.xlane.xlu0 %480
      %v482 = vadd.f32 %v402, %v403
      %483 = vadd.xlane.f32.xlu0 %v482
      %v484 = vpop.xlane.xlu0 %483
      %v485 = vadd.f32 %v404, %v405
      %486 = vadd.xlane.f32.xlu0 %v485
      %v487 = vpop.xlane.xlu0 %486
      %v488 = vadd.f32 %v406, %v407
      %489 = vadd.xlane.f32.xlu0 %v488
      %v490 = vpop.xlane.xlu0 %489
      %v491 = vadd.f32 %v408, %v409
      %492 = vadd.xlane.f32.xlu0 %v491
      %v493 = vpop.xlane.xlu0 %492
      %v494 = vadd.f32 %v410, %v411
      %495 = vadd.xlane.f32.xlu0 %v494
      %v496 = vpop.xlane.xlu0 %495
      %v497 = vadd.f32 %v412, %v413
      %498 = vadd.xlane.f32.xlu0 %v497
      %v499 = vpop.xlane.xlu0 %498
      %v500 = vadd.f32 %v414, %v415
      %501 = vadd.xlane.f32.xlu0 %v500
      %v502 = vpop.xlane.xlu0 %501
      %v503 = vadd.f32 %v416, %v417
      %504 = vadd.xlane.f32.xlu0 %v503
      %v505 = vpop.xlane.xlu0 %504
      %v506 = vadd.f32 %v418, %v419
      %507 = vadd.xlane.f32.xlu0 %v506
      %v508 = vpop.xlane.xlu0 %507
      %v509 = vadd.f32 %v420, %v421
      %510 = vadd.xlane.f32.xlu0 %v509
      %v511 = vpop.xlane.xlu0 %510
      %v512 = vadd.f32 %v422, %v423
      %513 = vadd.xlane.f32.xlu0 %v512
      %v514 = vpop.xlane.xlu0 %513
      %v515 = vadd.f32 %v424, %v425
      %516 = vadd.xlane.f32.xlu0 %v515
      %v517 = vpop.xlane.xlu0 %516
      %v518 = vadd.f32 %v426, %v427
      %519 = vadd.xlane.f32.xlu0 %v518
      %v520 = vpop.xlane.xlu0 %519
      %v521 = vadd.f32 %v428, %v429
      %522 = vadd.xlane.f32.xlu0 %v521
      %v523 = vpop.xlane.xlu0 %522
      %v524 = vadd.f32 %v430, %v431
      %525 = vadd.xlane.f32.xlu0 %v524
      %v526 = vpop.xlane.xlu0 %525
      %v527 = vadd.f32 %v432, %v433
      %528 = vadd.xlane.f32.xlu0 %v527
      %v529 = vpop.xlane.xlu0 %528
      %v530 = vmul.f32 %v436, 0.00390625
      %v531 = vmul.f32 %v439, 0.00390625
      %v532 = vmul.f32 %v442, 0.00390625
      %v533 = vmul.f32 %v445, 0.00390625
      %v534 = vmul.f32 %v448, 0.00390625
      %v535 = vmul.f32 %v451, 0.00390625
      %v536 = vmul.f32 %v454, 0.00390625
      %v537 = vmul.f32 %v457, 0.00390625
      %v538 = vmul.f32 %v460, 0.00390625
      %v539 = vmul.f32 %v463, 0.00390625
      %v540 = vmul.f32 %v466, 0.00390625
      %v541 = vmul.f32 %v469, 0.00390625
      %v542 = vmul.f32 %v472, 0.00390625
      %v543 = vmul.f32 %v475, 0.00390625
      %v544 = vmul.f32 %v478, 0.00390625
      %v545 = vmul.f32 %v481, 0.00390625
      %v546 = vmul.f32 %v484, 0.00390625
      %v547 = vmul.f32 %v487, 0.00390625
      %v548 = vmul.f32 %v490, 0.00390625
      %v549 = vmul.f32 %v493, 0.00390625
      %v550 = vmul.f32 %v496, 0.00390625
      %v551 = vmul.f32 %v499, 0.00390625
      %v552 = vmul.f32 %v502, 0.00390625
      %v553 = vmul.f32 %v505, 0.00390625
      %v554 = vmul.f32 %v508, 0.00390625
      %v555 = vmul.f32 %v511, 0.00390625
      %v556 = vmul.f32 %v514, 0.00390625
      %v557 = vmul.f32 %v517, 0.00390625
      %v558 = vmul.f32 %v520, 0.00390625
      %v559 = vmul.f32 %v523, 0.00390625
      %v560 = vmul.f32 %v526, 0.00390625
      %v561 = vmul.f32 %v529, 0.00390625
      %v562 = vld [vmem:[#allocation6] sm:$0xff]
      %v563 = vld [vmem:[#allocation6 + $0x8] sm:$0xff]
      %v564 = vld [vmem:[#allocation6 + $0x10] sm:$0xff]
      %v565 = vld [vmem:[#allocation6 + $0x18] sm:$0xff]
      %v566 = vld [vmem:[%s2] sm:$0x1]
      %v568 = vlaneseq
      %v569 = vshrl.u32 %v568, 7
      %v570 = vsub.s32 0, %v569
      %v571 = vrot.slane %v566, %v570
      %v605 = vlaneseq
      %v606 = vand.u32 %v605, 127
      %v607 = vlaneseq
      %v608 = vshrl.u32 %v607, 7
      %v609 = vsub.s32 %v606, %v608
      %v610 = vrot.slane %v530, %v609
      %v611 = vadd.s32 %v606, 4294967288
      %v612 = vlaneseq
      %v613 = vshrl.u32 %v612, 7
      %v614 = vsub.s32 %v611, %v613
      %v615 = vrot.slane %v531, %v614
      %vm616 = vcmask 130112
      %v617 = vsel %vm616, %v615, %v610
      %v618 = vadd.s32 %v606, 4294967280
      %v619 = vlaneseq
      %v620 = vshrl.u32 %v619, 7
      %v621 = vsub.s32 %v618, %v620
      %v622 = vrot.slane %v532, %v621
      %vm623 = vcmask 195712
      %v624 = vsel %vm623, %v622, %v617
      %v625 = vadd.s32 %v606, 4294967272
      %v626 = vlaneseq
      %v627 = vshrl.u32 %v626, 7
      %v628 = vsub.s32 %v625, %v627
      %v629 = vrot.slane %v533, %v628
      %vm630 = vcmask 261312
      %v631 = vsel %vm630, %v629, %v624
      %v632 = vlaneseq
      %v633 = vshrl.u32 %v632, 7
      %v634 = vsub.s32 %v606, %v633
      %v635 = vrot.slane %v534, %v634
      %v636 = vlaneseq
      %v637 = vshrl.u32 %v636, 7
      %v638 = vsub.s32 %v611, %v637
      %v639 = vrot.slane %v535, %v638
      %v640 = vsel %vm616, %v639, %v635
      %v641 = vlaneseq
      %v642 = vshrl.u32 %v641, 7
      %v643 = vsub.s32 %v618, %v642
      %v644 = vrot.slane %v536, %v643
      %v645 = vsel %vm623, %v644, %v640
      %v646 = vlaneseq
      %v647 = vshrl.u32 %v646, 7
      %v648 = vsub.s32 %v625, %v647
      %v649 = vrot.slane %v537, %v648
      %v650 = vsel %vm630, %v649, %v645
      %v651 = vlaneseq
      %v652 = vshrl.u32 %v651, 7
      %v653 = vsub.s32 %v606, %v652
      %v654 = vrot.slane %v538, %v653
      %v655 = vlaneseq
      %v656 = vshrl.u32 %v655, 7
      %v657 = vsub.s32 %v611, %v656
      %v658 = vrot.slane %v539, %v657
      %v659 = vsel %vm616, %v658, %v654
      %v660 = vlaneseq
      %v661 = vshrl.u32 %v660, 7
      %v662 = vsub.s32 %v618, %v661
      %v663 = vrot.slane %v540, %v662
      %v664 = vsel %vm623, %v663, %v659
      %v665 = vlaneseq
      %v666 = vshrl.u32 %v665, 7
      %v667 = vsub.s32 %v625, %v666
      %v668 = vrot.slane %v541, %v667
      %v669 = vsel %vm630, %v668, %v664
      %v670 = vlaneseq
      %v671 = vshrl.u32 %v670, 7
      %v672 = vsub.s32 %v606, %v671
      %v673 = vrot.slane %v542, %v672
      %v674 = vlaneseq
      %v675 = vshrl.u32 %v674, 7
      %v676 = vsub.s32 %v611, %v675
      %v677 = vrot.slane %v543, %v676
      %v678 = vsel %vm616, %v677, %v673
      %v679 = vlaneseq
      %v680 = vshrl.u32 %v679, 7
      %v681 = vsub.s32 %v618, %v680
      %v682 = vrot.slane %v544, %v681
      %v683 = vsel %vm623, %v682, %v678
      %v684 = vlaneseq
      %v685 = vshrl.u32 %v684, 7
      %v686 = vsub.s32 %v625, %v685
      %v687 = vrot.slane %v545, %v686
      %v688 = vsel %vm630, %v687, %v683
      %v689 = vlaneseq
      %v690 = vshrl.u32 %v689, 7
      %v691 = vsub.s32 %v606, %v690
      %v692 = vrot.slane %v546, %v691
      %v693 = vlaneseq
      %v694 = vshrl.u32 %v693, 7
      %v695 = vsub.s32 %v611, %v694
      %v696 = vrot.slane %v547, %v695
      %v697 = vsel %vm616, %v696, %v692
      %v698 = vlaneseq
      %v699 = vshrl.u32 %v698, 7
      %v700 = vsub.s32 %v618, %v699
      %v701 = vrot.slane %v548, %v700
      %v702 = vsel %vm623, %v701, %v697
      %v703 = vlaneseq
      %v704 = vshrl.u32 %v703, 7
      %v705 = vsub.s32 %v625, %v704
      %v706 = vrot.slane %v549, %v705
      %v707 = vsel %vm630, %v706, %v702
      %v708 = vlaneseq
      %v709 = vshrl.u32 %v708, 7
      %v710 = vsub.s32 %v606, %v709
      %v711 = vrot.slane %v550, %v710
      %v712 = vlaneseq
      %v713 = vshrl.u32 %v712, 7
      %v714 = vsub.s32 %v611, %v713
      %v715 = vrot.slane %v551, %v714
      %v716 = vsel %vm616, %v715, %v711
      %v717 = vlaneseq
      %v718 = vshrl.u32 %v717, 7
      %v719 = vsub.s32 %v618, %v718
      %v720 = vrot.slane %v552, %v719
      %v721 = vsel %vm623, %v720, %v716
      %v722 = vlaneseq
      %v723 = vshrl.u32 %v722, 7
      %v724 = vsub.s32 %v625, %v723
      %v725 = vrot.slane %v553, %v724
      %v726 = vsel %vm630, %v725, %v721
      %v727 = vlaneseq
      %v728 = vshrl.u32 %v727, 7
      %v729 = vsub.s32 %v606, %v728
      %v730 = vrot.slane %v554, %v729
      %v731 = vlaneseq
      %v732 = vshrl.u32 %v731, 7
      %v733 = vsub.s32 %v611, %v732
      %v734 = vrot.slane %v555, %v733
      %v735 = vsel %vm616, %v734, %v730
      %v736 = vlaneseq
      %v737 = vshrl.u32 %v736, 7
      %v738 = vsub.s32 %v618, %v737
      %v739 = vrot.slane %v556, %v738
      %v740 = vsel %vm623, %v739, %v735
      %v741 = vlaneseq
      %v742 = vshrl.u32 %v741, 7
      %v743 = vsub.s32 %v625, %v742
      %v744 = vrot.slane %v557, %v743
      %v745 = vsel %vm630, %v744, %v740
      %v746 = vlaneseq
      %v747 = vshrl.u32 %v746, 7
      %v748 = vsub.s32 %v606, %v747
      %v749 = vrot.slane %v558, %v748
      %v750 = vlaneseq
      %v751 = vshrl.u32 %v750, 7
      %v752 = vsub.s32 %v611, %v751
      %v753 = vrot.slane %v559, %v752
      %v754 = vsel %vm616, %v753, %v749
      %v755 = vlaneseq
      %v756 = vshrl.u32 %v755, 7
      %v757 = vsub.s32 %v618, %v756
      %v758 = vrot.slane %v560, %v757
      %v759 = vsel %vm623, %v758, %v754
      %v760 = vlaneseq
      %v761 = vshrl.u32 %v760, 7
      %v762 = vsub.s32 %v625, %v761
      %v763 = vrot.slane %v561, %v762
      %v764 = vsel %vm630, %v763, %v759
      %vm765 = vcmask 1041409
      %v766 = vsel %vm765, %v650, %v631
      %vm767 = vcmask 1042434
      %v768 = vsel %vm767, %v669, %v766
      %vm769 = vcmask 1043459
      %v770 = vsel %vm769, %v688, %v768
      %vm771 = vcmask 1044484
      %v772 = vsel %vm771, %v707, %v770
      %vm773 = vcmask 1045509
      %v774 = vsel %vm773, %v726, %v772
      %vm775 = vcmask 1046534
      %v776 = vsel %vm775, %v745, %v774
      %vm777 = vcmask 1047559
      %v778 = vsel %vm777, %v764, %v776
      %vm779 = vcmask 261120
      %v780 = vsel %vm779, %v778, 0
      %782 = vmatprep.subr.mxu0 0.0
      %783 = vmatpush1.msra.mxu0 %v562
      %784 = vmatprep.subr.mxu0 0.0
      %785 = vmatpush1.msra.mxu0 %v563
      %786 = vmatprep.subr.mxu0 0.0
      %787 = vmatpush1.msra.mxu0 %v564
      %788 = vmatprep.subr.mxu0 0.0
      %789 = vmatpush1.msra.mxu0 %v565
      %790 = vmatprep.subr.mxu0 0.0
      %791 = vmatpush1.msra.mxu0 0.0
      %792 = vmatprep.subr.mxu0 0.0
      %793 = vmatpush1.msra.mxu0 0.0
      %794 = vmatprep.subr.mxu0 0.0
      %795 = vmatpush1.msra.mxu0 0.0
      %796 = vmatprep.subr.mxu0 0.0
      %797 = vmatpush1.msra.mxu0 0.0
      %798 = vmatprep.subr.mxu0 0.0
      %799 = vmatpush1.msra.mxu0 0.0
      %800 = vmatprep.subr.mxu0 0.0
      %801 = vmatpush1.msra.mxu0 0.0
      %802 = vmatprep.subr.mxu0 0.0
      %803 = vmatpush1.msra.mxu0 0.0
      %804 = vmatprep.subr.mxu0 0.0
      %805 = vmatpush1.msra.mxu0 0.0
      %806 = vmatprep.subr.mxu0 0.0
      %807 = vmatpush1.msra.mxu0 0.0
      %808 = vmatprep.subr.mxu0 0.0
      %809 = vmatpush1.msra.mxu0 0.0
      %810 = vmatprep.subr.mxu0 0.0
      %811 = vmatpush1.msra.mxu0 0.0
      %812 = vmatprep.subr.mxu0 0.0
      %813 = vmatpush1.msra.mxu0 0.0
      %814 = vmatprep.subr.mxu0 0.0
      %815 = vmatpush1.msra.mxu0 0.0
      %816 = vmatprep.subr.mxu0 0.0
      %817 = vmatpush1.msra.mxu0 0.0
      %818 = vmatprep.subr.mxu0 0.0
      %819 = vmatpush1.msra.mxu0 0.0
      %820 = vmatprep.subr.mxu0 0.0
      %821 = vmatpush1.msra.mxu0 0.0
      %822 = vmatprep.subr.mxu0 0.0
      %823 = vmatpush1.msra.mxu0 0.0
      %824 = vmatprep.subr.mxu0 0.0
      %825 = vmatpush1.msra.mxu0 0.0
      %826 = vmatprep.subr.mxu0 0.0
      %827 = vmatpush1.msra.mxu0 0.0
      %828 = vmatprep.subr.mxu0 0.0
      %829 = vmatpush1.msra.mxu0 0.0
      %830 = vmatprep.subr.mxu0 0.0
      %831 = vmatpush1.msra.mxu0 0.0
      %832 = vmatprep.subr.mxu0 0.0
      %833 = vmatpush1.msra.mxu0 0.0
      %834 = vmatprep.subr.mxu0 0.0
      %835 = vmatpush1.msra.mxu0 0.0
      %836 = vmatprep.subr.mxu0 0.0
      %837 = vmatpush1.msra.mxu0 0.0
      %838 = vmatprep.subr.mxu0 0.0
      %839 = vmatpush1.msra.mxu0 0.0
      %840 = vmatprep.subr.mxu0 0.0
      %841 = vmatpush1.msra.mxu0 0.0
      %842 = vmatprep.subr.mxu0 0.0
      %843 = vmatpush1.msra.mxu0 0.0
      %844 = vmatprep.subr.mxu0 0.0
      %845 = vmatpush1.msra.mxu0 0.0
      %846 = vmatprep.mubr.f32.mxu0 0.0
      %847 = vmatmul.mubr.f32.gmra.mrb[0].mxu0 %v780
      %v848 = vpop.f32.mrb[0].mxu0
      %v849 = vadd.f32 %v571, %v848
      %v850 = vpop.f32.mrb[0].mxu0
      %851 = vdwg.mxu0
      %852 = vst [vmem:[#allocation8] sm:$0xff] %v849
    $region29: #{tpu_custom_call.1} parent=1 // pred_fallthru
      _
    // Predicated region
    $region30: #{tpu_custom_call.1} parent=1 // pred_check
      _
    $region31: #{tpu_custom_call.1} parent=1 // pred_check_branch
      %854 = sbr.rel (0) target = $region33
    $region32: #{tpu_custom_call.1} parent=1 // pred_region
      %s856 = ssub.s32 128, 128
      %857 = vsyncadd [#allocation5], %s856
      %s859 = sshll.u32 [#allocation8], 4
      %s860 = int_to_ptr.vmem [resolvable:$true] %s859
      %862 = dma.vmem_to_hbm [thread:$0]  %s860, 128, %s3, [#allocation5]
    $region33: #{tpu_custom_call.1} parent=1 // pred_fallthru
      _
    // Predicated region
    $region34: #{tpu_custom_call.1} parent=1 // pred_check
      _
    $region35: #{tpu_custom_call.1} parent=1 // pred_check_branch
      %864 = sbr.rel (0) target = $region37
    $region36: #{tpu_custom_call.1} parent=1 // pred_region
      %865 = dma.done [#allocation5], 128
    $region37: #{tpu_custom_call.1} parent=1 // pred_fallthru
      _
    %866 = vsyncpa [#allocation4], 1
    %867 = vsyncpa [#allocation7], 1
    %868 = vsyncpa [#allocation5], 1

</llo_original>
